<compile_context>
chip_gen: v5e
topology: v5e:2x2
jax: 0.10.0
libtpu: 0.0.40
codegen_flags: <defaults>
</compile_context>

<pallas_src>
import jax
import jax.numpy as jnp
from jax.experimental import pallas as pl
from jax.experimental.pallas import tpu as pltpu


def _round_up(n, m):
    return ((n + m - 1) // m) * m


def _cdiv(a, b):
    return -(-a // b)


def _pick_hidden_chunk(in_p):
    """Largest chunk <= 512 that divides in_p (in_p is a multiple of 128)."""
    if in_p <= 512:
        return in_p
    for cand in (512, 256, 128):
        if in_p % cand == 0:
            return cand
    return 128


def _make_projection_head_kernel(hidden_chunk, n_chunks):
    """Fused: out = relu(x @ W1t + b1) @ W2t + b2, hidden dim chunked."""

    def kernel(x_ref, w1t_ref, b1_ref, w2t_ref, b2_ref, o_ref, acc_ref):
        x = x_ref[...]                                            # (tm, in_p)
        if n_chunks == 1:
            # Single-shot path: no need to round-trip through the scratch.
            h = jnp.dot(x, w1t_ref[...],
                        preferred_element_type=jnp.float32)       # (tm, in_p)
            h = jnp.maximum(h + b1_ref[...], 0.0)                 # f32 bias+ReLU
            h = h.astype(w2t_ref.dtype)
            out = jnp.dot(h, w2t_ref[...],
                          preferred_element_type=jnp.float32)     # (tm, out_p)
            o_ref[...] = (out + b2_ref[...]).astype(o_ref.dtype)
        else:
            acc_ref[...] = jnp.zeros_like(acc_ref)
            # Static (trace-time) unroll over hidden chunks; slices of the
            # resident weight refs are zero-cost views.
            for c in range(n_chunks):
                lo = c * hidden_chunk
                hi = lo + hidden_chunk
                h = jnp.dot(x, w1t_ref[:, lo:hi],
                            preferred_element_type=jnp.float32)   # (tm, C)
                h = jnp.maximum(h + b1_ref[:, lo:hi], 0.0)
                h = h.astype(w2t_ref.dtype)
                acc_ref[...] += jnp.dot(h, w2t_ref[lo:hi, :],
                                        preferred_element_type=jnp.float32)
            o_ref[...] = (acc_ref[...] + b2_ref[...]).astype(o_ref.dtype)

    return kernel


def prepare_projection_head_params(w1, b1, w2, b2, compute_dtype=jnp.bfloat16):
    """One-time (load-time) prep: transpose to (K, N), pad features to
    multiples of 128 lanes, cast weights to the compute dtype (bf16 default).

    w1: (in_dim, in_dim), b1: (in_dim,), w2: (out_dim, in_dim), b2: (out_dim,)
    -- PyTorch nn.Linear convention."""
    in_dim = w1.shape[1]
    out_dim = w2.shape[0]
    in_p = _round_up(in_dim, 128)
    out_p = _round_up(out_dim, 128)
    cdt = compute_dtype if compute_dtype is not None else w1.dtype

    w1t = jnp.zeros((in_p, in_p), cdt).at[:in_dim, :in_dim].set(
        w1.T.astype(cdt))
    w2t = jnp.zeros((in_p, out_p), cdt).at[:in_dim, :out_dim].set(
        w2.T.astype(cdt))
    # Biases kept in f32 (elementwise tail stays f32 on all generations).
    b1p = jnp.zeros((1, in_p), jnp.float32).at[:, :in_dim].set(
        b1.astype(jnp.float32))
    b2p = jnp.zeros((1, out_p), jnp.float32).at[:, :out_dim].set(
        b2.astype(jnp.float32))
    return (w1t, b1p, w2t, b2p, in_dim, out_dim)


def projection_head_forward(x, prepared, *, block_m=512):
    """x: (B, in_dim). `prepared` comes from prepare_projection_head_params."""
    w1t, b1p, w2t, b2p, in_dim, out_dim = prepared
    B = x.shape[0]
    in_p = w1t.shape[0]
    out_p = w2t.shape[1]
    cdt = w1t.dtype
    itemsize = jnp.dtype(cdt).itemsize
    out_dtype = x.dtype
    out_itemsize = jnp.dtype(out_dtype).itemsize

    # --- batch tiling: even tiles, minimal padding, >=2 tiles when B >= 16
    # (keeps both v7x TensorCores busy; v5e/v6e unaffected). ----------------
    n_tiles = max(1, _cdiv(B, block_m))
    if n_tiles == 1 and B >= 16:
        n_tiles = 2
    tm = _round_up(_cdiv(B, n_tiles), 8)
    bp = _round_up(B, tm)
    grid = (bp // tm,)

    # --- wrapper-side pad of x only when actually needed -------------------
    if (in_dim != in_p) or (B != bp):
        xp = jnp.zeros((bp, in_p), cdt).at[:B, :in_dim].set(x.astype(cdt))
    else:
        xp = x.astype(cdt)   # no-op if dtypes already match

    hidden_chunk = _pick_hidden_chunk(in_p)
    n_chunks = in_p // hidden_chunk
    kernel = _make_projection_head_kernel(hidden_chunk, n_chunks)

    # --- VMEM budget: double-buffered x/out tiles, single-buffered resident
    # weights/biases, f32 accumulator scratch, live h chunk (f32 + cdt copy).
    vmem_bytes = (
        2 * tm * in_p * itemsize                    # x tile (double-buffered)
        + 2 * tm * out_p * out_itemsize             # out tile (double-buffered)
        + (in_p * in_p + in_p * out_p) * itemsize   # W1t, W2t (single-buffered)
        + (in_p + out_p) * 4                        # b1, b2 (f32)
        + tm * out_p * 4                            # f32 accumulator scratch
        + tm * hidden_chunk * (4 + itemsize)        # live h chunk
    )
    try:
        vmem_cap = int(pltpu.get_tpu_info().vmem_capacity_bytes)
    except Exception:
        vmem_cap = 64 << 20                         # conservative (v7x per-TC)
    cap = max(vmem_cap - (8 << 20), 16 << 20)       # compiler-scratch headroom
    vmem_limit = int(min(max(vmem_bytes + (4 << 20), 32 << 20), cap))

    flops = 2 * bp * in_p * (in_p + out_p)
    bytes_accessed = int(
        xp.size * itemsize + w1t.size * itemsize + w2t.size * itemsize
        + (b1p.size + b2p.size) * 4 + bp * out_p * out_itemsize)

    out_padded = pl.pallas_call(
        kernel,
        out_shape=jax.ShapeDtypeStruct((bp, out_p), out_dtype),
        grid_spec=pltpu.PrefetchScalarGridSpec(
            num_scalar_prefetch=0,
            grid=grid,
            in_specs=[
                # x tile moves with the grid (default double-buffered).
                pl.BlockSpec((tm, in_p), lambda i: (i, 0)),
                # Resident weights/biases: constant index, single-buffered.
                pl.BlockSpec((in_p, in_p), lambda i: (0, 0),
                             pipeline_mode=pl.Buffered(1)),
                pl.BlockSpec((1, in_p), lambda i: (0, 0),
                             pipeline_mode=pl.Buffered(1)),
                pl.BlockSpec((in_p, out_p), lambda i: (0, 0),
                             pipeline_mode=pl.Buffered(1)),
                pl.BlockSpec((1, out_p), lambda i: (0, 0),
                             pipeline_mode=pl.Buffered(1)),
            ],
            out_specs=pl.BlockSpec((tm, out_p), lambda i: (i, 0)),
            scratch_shapes=[pltpu.VMEM((tm, out_p), jnp.float32)],
        ),
        compiler_params=pltpu.CompilerParams(
            dimension_semantics=("parallel",),   # megacore-shard batch tiles
            vmem_limit_bytes=vmem_limit,
        ),
        cost_estimate=pl.CostEstimate(
            flops=flops, transcendentals=0, bytes_accessed=bytes_accessed),
    )(xp, w1t, b1p, w2t, b2p)

    # Slice padding off only if any was added.
    if (B != bp) or (out_dim != out_p):
        return out_padded[:B, :out_dim]
    return out_padded


def init_projection_head_params(key, in_dim, out_dim, dtype=jnp.float32):
    """Deterministic init matching nn.Linear shapes (uniform in ±1/sqrt(fan_in))."""
    k1, k2, k3, k4 = jax.random.split(key, 4)
    lim = 1.0 / jnp.sqrt(jnp.array(in_dim, dtype))
    w1 = jax.random.uniform(k1, (in_dim, in_dim), dtype, -lim, lim)
    b1 = jax.random.uniform(k2, (in_dim,), dtype, -lim, lim)
    w2 = jax.random.uniform(k3, (out_dim, in_dim), dtype, -lim, lim)
    b2 = jax.random.uniform(k4, (out_dim,), dtype, -lim, lim)
    return w1, b1, w2, b2


if __name__ == "__main__":
    key = jax.random.PRNGKey(0)
    kx, kp = jax.random.split(key)

    batch, in_dim, out_dim = 8, 32, 16
    x = jax.random.normal(kx, (batch, in_dim), jnp.float32)
    w1, b1, w2, b2 = init_projection_head_params(kp, in_dim, out_dim)

    # Reference in plain JAX (same math as the PyTorch module).
    ref = jnp.maximum(x @ w1.T + b1, 0.0) @ w2.T + b2

    # 1) f32 compute path: tight-tolerance correctness check.
    prepared_f32 = prepare_projection_head_params(
        w1, b1, w2, b2, compute_dtype=jnp.float32)
    out_f32 = jax.block_until_ready(projection_head_forward(x, prepared_f32))
    assert out_f32.shape == (batch, out_dim)
    assert jnp.allclose(out_f32, ref, atol=1e-5, rtol=1e-5)

    # 2) Production (default) bf16 compute path: looser tolerance.
    prepared_bf16 = prepare_projection_head_params(w1, b1, w2, b2)
    out_bf16 = jax.block_until_ready(projection_head_forward(x, prepared_bf16))
    assert out_bf16.shape == (batch, out_dim)
    assert jnp.allclose(out_bf16, ref, atol=5e-2, rtol=5e-2)

    print("KERNEL_OK")
</pallas_src>

<mosaic_0001>
module attributes {stable_mosaic.version = 11 : i64} {
  func.func @kernel(%arg0: i32, %arg1: memref<8x128xf32, #tpu.memory_space<vmem>>, %arg2: memref<128x128xf32, #tpu.memory_space<vmem>>, %arg3: memref<1x128xf32, #tpu.memory_space<vmem>>, %arg4: memref<128x128xf32, #tpu.memory_space<vmem>>, %arg5: memref<1x128xf32, #tpu.memory_space<vmem>>, %arg6: memref<8x128xf32, #tpu.memory_space<vmem>>, %arg7: memref<8x128xf32, #tpu.memory_space<vmem>>) attributes {dimension_semantics = [#tpu.dimension_semantics<parallel>], iteration_bounds = array<i64: 1>, scalar_prefetch = 0 : i64, scratch_operands = 1 : i64, tpu.core_type = #tpu.core_type<tc>, window_params = [{transform_indices = @transform_0, window_bounds = array<i64: 8, 128>}, {pipeline_mode = #tpu.pipeline_mode<synchronous>, transform_indices = @transform_1, window_bounds = array<i64: 128, 128>}, {pipeline_mode = #tpu.pipeline_mode<synchronous>, transform_indices = @transform_2, window_bounds = array<i64: 1, 128>}, {pipeline_mode = #tpu.pipeline_mode<synchronous>, transform_indices = @transform_3, window_bounds = array<i64: 128, 128>}, {pipeline_mode = #tpu.pipeline_mode<synchronous>, transform_indices = @transform_4, window_bounds = array<i64: 1, 128>}, {transform_indices = @transform_5, window_bounds = array<i64: 8, 128>}]} {
    %c0 = arith.constant 0 : index
    %c0_0 = arith.constant 0 : index
    %0 = vector.load %arg1[%c0, %c0_0] : memref<8x128xf32, #tpu.memory_space<vmem>>, vector<8x128xf32>
    %c0_1 = arith.constant 0 : index
    %c0_2 = arith.constant 0 : index
    %1 = vector.load %arg2[%c0_1, %c0_2] : memref<128x128xf32, #tpu.memory_space<vmem>>, vector<128x128xf32>
    %cst = arith.constant dense<0.000000e+00> : vector<8x128xf32>
    %2 = tpu.matmul %0, %1, %cst {dimension_numbers = #tpu.dot_dimension_numbers<[1], [0], [0], [1], [0, 0, 1, 1], [], []>} : vector<8x128xf32>, vector<128x128xf32>, vector<8x128xf32> -> vector<8x128xf32>
    %c0_3 = arith.constant 0 : index
    %c0_4 = arith.constant 0 : index
    %3 = vector.load %arg3[%c0_3, %c0_4] : memref<1x128xf32, #tpu.memory_space<vmem>>, vector<1x128xf32>
    %4 = vector.broadcast %3 : vector<1x128xf32> to vector<8x128xf32>
    %5 = arith.addf %2, %4 : vector<8x128xf32>
    %cst_5 = arith.constant 0.000000e+00 : f32
    %6 = vector.broadcast %cst_5 : f32 to vector<8x128xf32>
    %7 = arith.maximumf %5, %6 : vector<8x128xf32>
    %c0_6 = arith.constant 0 : index
    %c0_7 = arith.constant 0 : index
    %8 = vector.load %arg4[%c0_6, %c0_7] : memref<128x128xf32, #tpu.memory_space<vmem>>, vector<128x128xf32>
    %cst_8 = arith.constant dense<0.000000e+00> : vector<8x128xf32>
    %9 = tpu.matmul %7, %8, %cst_8 {dimension_numbers = #tpu.dot_dimension_numbers<[1], [0], [0], [1], [0, 0, 1, 1], [], []>} : vector<8x128xf32>, vector<128x128xf32>, vector<8x128xf32> -> vector<8x128xf32>
    %c0_9 = arith.constant 0 : index
    %c0_10 = arith.constant 0 : index
    %10 = vector.load %arg5[%c0_9, %c0_10] : memref<1x128xf32, #tpu.memory_space<vmem>>, vector<1x128xf32>
    %11 = vector.broadcast %10 : vector<1x128xf32> to vector<8x128xf32>
    %12 = arith.addf %9, %11 : vector<8x128xf32>
    %c0_11 = arith.constant 0 : index
    %c0_12 = arith.constant 0 : index
    %13 = vector.load %arg6[%c0_11, %c0_12] : memref<8x128xf32, #tpu.memory_space<vmem>>, vector<8x128xf32>
    tpu.vector_store %arg6[%c0_11, %c0_12], %12 {strides = array<i32>} : memref<8x128xf32, #tpu.memory_space<vmem>>, vector<8x128xf32>,
    return
  }
  func.func @transform_0(%arg0: i32) -> (i32, i32) {
    %c0_i32 = arith.constant 0 : i32
    %c0_i32_0 = arith.constant 0 : i32
    return %arg0, %c0_i32 : i32, i32
  }
  func.func @transform_1(%arg0: i32) -> (i32, i32) {
    %c0_i32 = arith.constant 0 : i32
    %c0_i32_0 = arith.constant 0 : i32
    %c0_i32_1 = arith.constant 0 : i32
    return %c0_i32, %c0_i32_0 : i32, i32
  }
  func.func @transform_2(%arg0: i32) -> (i32, i32) {
    %c0_i32 = arith.constant 0 : i32
    %c0_i32_0 = arith.constant 0 : i32
    %c0_i32_1 = arith.constant 0 : i32
    return %c0_i32, %c0_i32_0 : i32, i32
  }
  func.func @transform_3(%arg0: i32) -> (i32, i32) {
    %c0_i32 = arith.constant 0 : i32
    %c0_i32_0 = arith.constant 0 : i32
    %c0_i32_1 = arith.constant 0 : i32
    return %c0_i32, %c0_i32_0 : i32, i32
  }
  func.func @transform_4(%arg0: i32) -> (i32, i32) {
    %c0_i32 = arith.constant 0 : i32
    %c0_i32_0 = arith.constant 0 : i32
    %c0_i32_1 = arith.constant 0 : i32
    return %c0_i32, %c0_i32_0 : i32, i32
  }
  func.func @transform_5(%arg0: i32) -> (i32, i32) {
    %c0_i32 = arith.constant 0 : i32
    %c0_i32_0 = arith.constant 0 : i32
    return %arg0, %c0_i32 : i32, i32
  }
}

</mosaic_0001>

<llo_original>
// kernel: tpu_custom_call.1
$region0: #{tpu_custom_call.1}
  #allocation0 [shape = 'u32[]', space=smem, size = 0x4, offset = 0x4, fixed_abs, tag = 'smem constant byte address 0x4 - core index']
  #allocation1 [shape = 'u32[72,128]{1,0:T(1,128)}', space=vmem, size = 0x9000, scoped, tag = 'internal scratch']
  #allocation2 [shape = 'f32[8,128]{1,0:T(8,128)}', space=vmem, size = 0x1000, scoped, tag = 'scratch operand']
  %s0 = inlined_call_operand.hbm [shape: f32[8,128], index: 0, kind: input, shape index: {}]
  %s1 = inlined_call_operand.hbm [shape: f32[128,128], index: 1, kind: input, shape index: {}]
  %s2 = inlined_call_operand.vmem [shape: f32[1,128], index: 2, kind: input, shape index: {}]
  %s3 = inlined_call_operand.hbm [shape: f32[128,128], index: 3, kind: input, shape index: {}]
  %s4 = inlined_call_operand.vmem [shape: f32[1,128], index: 4, kind: input, shape index: {}]
  %s5 = inlined_call_operand.hbm [shape: f32[8,128], index: 5, kind: output, shape index: {}]
  %s6 = sld [smem:[#allocation0]]
  $region42: #{tpu_custom_call.1} parent=0
    _
  %s8 = ssub.s32 1, %s6
  %s9 = scalar_select 0, %s8, %s6
  $region1: #{tpu_custom_call.1} parent=0
    #allocation3 [shape = 'u8[4096]{0}', space=vmem, size = 0x1000, scoped, tag = 'input window, operand 0, single buffered']
    #allocation4 [shape = 's32[1]{0}', space=sflag, size = 0x4, scoped, tag = 'scoped memory for tpu_custom_call.1']
    #allocation5 [shape = 's32[1]{0}', space=sflag, size = 0x4, scoped, tag = 'scoped memory for tpu_custom_call.1']
    #allocation6 [shape = 'u8[65536]{0}', space=vmem, size = 0x10000, scoped, tag = 'input window, operand 1, single buffered']
    #allocation7 [shape = 's32[1]{0}', space=sflag, size = 0x4, scoped, tag = 'scoped memory for tpu_custom_call.1']
    #allocation8 [shape = 'u8[65536]{0}', space=vmem, size = 0x10000, scoped, tag = 'input window, operand 3, single buffered']
    #allocation9 [shape = 'u8[4096]{0}', space=vmem, size = 0x1000, scoped, tag = 'output window, operand 0, single buffered']
    %10 = vsyncpa [#allocation4], 0
    %11 = vsyncpa [#allocation7], 0
    %12 = vsyncpa [#allocation5], 0
    // Predicated region
    $region2: #{tpu_custom_call.1} parent=1 // pred_check
      _
    $region3: #{tpu_custom_call.1} parent=1 // pred_check_branch
      %14 = sbr.rel (0) target = $region5
    $region4: #{tpu_custom_call.1} parent=1 // pred_region
      %16 = vsyncadd [#allocation4], 0
      %s18 = sshll.u32 %s0, 4
      %s19 = int_to_ptr.hbm [resolvable:$true] %s18
      %s20 = sshll.u32 [#allocation3], 4
      %s21 = int_to_ptr.vmem [resolvable:$true] %s20
      %23 = dma.hbm_to_vmem [thread:$0]  %s19, 128, %s21, [#allocation4]
    $region5: #{tpu_custom_call.1} parent=1 // pred_fallthru
      _
    // Predicated region
    $region6: #{tpu_custom_call.1} parent=1 // pred_check
      _
    $region7: #{tpu_custom_call.1} parent=1 // pred_check_branch
      %25 = sbr.rel (0) target = $region9
    $region8: #{tpu_custom_call.1} parent=1 // pred_region
      %27 = vsyncadd [#allocation7], 0
      %s28 = sshll.u32 %s1, 4
      %s29 = int_to_ptr.hbm [resolvable:$true] %s28
      %s30 = sshll.u32 [#allocation6], 4
      %s31 = int_to_ptr.vmem [resolvable:$true] %s30
      %36 = dma.hbm_to_vmem [thread:$0]  %s29, 2048, %s31, [#allocation7], 128, 128, 8
    $region9: #{tpu_custom_call.1} parent=1 // pred_fallthru
      _
    // Predicated region
    $region10: #{tpu_custom_call.1} parent=1 // pred_check
      _
    $region11: #{tpu_custom_call.1} parent=1 // pred_check_branch
      %38 = sbr.rel (0) target = $region13
    $region12: #{tpu_custom_call.1} parent=1 // pred_region
      _
    $region13: #{tpu_custom_call.1} parent=1 // pred_fallthru
      _
    // Predicated region
    $region14: #{tpu_custom_call.1} parent=1 // pred_check
      _
    $region15: #{tpu_custom_call.1} parent=1 // pred_check_branch
      %40 = sbr.rel (0) target = $region17
    $region16: #{tpu_custom_call.1} parent=1 // pred_region
      %42 = vsyncadd [#allocation7], 0
      %s43 = sshll.u32 %s3, 4
      %s44 = int_to_ptr.hbm [resolvable:$true] %s43
      %s45 = sshll.u32 [#allocation8], 4
      %s46 = int_to_ptr.vmem [resolvable:$true] %s45
      %51 = dma.hbm_to_vmem [thread:$0]  %s44, 2048, %s46, [#allocation7], 128, 128, 8
    $region17: #{tpu_custom_call.1} parent=1 // pred_fallthru
      _
    // Predicated region
    $region18: #{tpu_custom_call.1} parent=1 // pred_check
      _
    $region19: #{tpu_custom_call.1} parent=1 // pred_check_branch
      %53 = sbr.rel (0) target = $region21
    $region20: #{tpu_custom_call.1} parent=1 // pred_region
      _
    $region21: #{tpu_custom_call.1} parent=1 // pred_fallthru
      _
    // Predicated region
    $region22: #{tpu_custom_call.1} parent=1 // pred_check
      _
    $region23: #{tpu_custom_call.1} parent=1 // pred_check_branch
      %55 = sbr.rel (0) target = $region25
    $region24: #{tpu_custom_call.1} parent=1 // pred_region
      %57 = dma.done [#allocation4], 128
    $region25: #{tpu_custom_call.1} parent=1 // pred_fallthru
      _
    // Predicated region
    $region26: #{tpu_custom_call.1} parent=1 // pred_check
      _
    $region27: #{tpu_custom_call.1} parent=1 // pred_check_branch
      %59 = sbr.rel (0) target = $region29
    $region28: #{tpu_custom_call.1} parent=1 // pred_region
      %61 = dma.done [#allocation7], 2048
    $region29: #{tpu_custom_call.1} parent=1 // pred_fallthru
      _
    // Predicated region
    $region30: #{tpu_custom_call.1} parent=1 // pred_check
      _
    $region31: #{tpu_custom_call.1} parent=1 // pred_check_branch
      %63 = sbr.rel (0) target = $region33
    $region32: #{tpu_custom_call.1} parent=1 // pred_region
      %65 = dma.done [#allocation7], 2048
    $region33: #{tpu_custom_call.1} parent=1 // pred_fallthru
      _
    %v66 = vld [vmem:[#allocation3] sm:$0xff]
    %v67 = vld [vmem:[#allocation6] sm:$0xff]
    %v68 = vld [vmem:[#allocation6 + $0x8] sm:$0xff]
    %v69 = vld [vmem:[#allocation6 + $0x10] sm:$0xff]
    %v70 = vld [vmem:[#allocation6 + $0x18] sm:$0xff]
    %v71 = vld [vmem:[#allocation6 + $0x20] sm:$0xff]
    %v72 = vld [vmem:[#allocation6 + $0x28] sm:$0xff]
    %v73 = vld [vmem:[#allocation6 + $0x30] sm:$0xff]
    %v74 = vld [vmem:[#allocation6 + $0x38] sm:$0xff]
    %v75 = vld [vmem:[#allocation6 + $0x40] sm:$0xff]
    %v76 = vld [vmem:[#allocation6 + $0x48] sm:$0xff]
    %v77 = vld [vmem:[#allocation6 + $0x50] sm:$0xff]
    %v78 = vld [vmem:[#allocation6 + $0x58] sm:$0xff]
    %v79 = vld [vmem:[#allocation6 + $0x60] sm:$0xff]
    %v80 = vld [vmem:[#allocation6 + $0x68] sm:$0xff]
    %v81 = vld [vmem:[#allocation6 + $0x70] sm:$0xff]
    %v82 = vld [vmem:[#allocation6 + $0x78] sm:$0xff]
    %v83 = vld [vmem:[%s2] sm:$0x1]
    %v85 = vperm.slane %v83, 0
    %87 = vmatpush.msra.mxu0 %v82
    %88 = vmatpush.msra.mxu0 %v81
    %89 = vmatpush.msra.mxu0 %v80
    %90 = vmatpush.msra.mxu0 %v79
    %91 = vmatpush.msra.mxu0 %v78
    %92 = vmatpush.msra.mxu0 %v77
    %93 = vmatpush.msra.mxu0 %v76
    %94 = vmatpush.msra.mxu0 %v75
    %95 = vmatpush.msra.mxu0 %v74
    %96 = vmatpush.msra.mxu0 %v73
    %97 = vmatpush.msra.mxu0 %v72
    %98 = vmatpush.msra.mxu0 %v71
    %99 = vmatpush.msra.mxu0 %v70
    %100 = vmatpush.msra.mxu0 %v69
    %101 = vmatpush.msra.mxu0 %v68
    %102 = vmatpush.msra.mxu0 %v67
    %103 = vmatmul.f32.gmra.mxu0 %v66
    %v104 = vpop.f32.mrf.mxu0
    %v105 = vadd.f32 %v85, %v104
    %106 = vdwg.mxu0
    %v107 = vmax.f32 %v105, 0.0
    %v108 = vld [vmem:[#allocation8] sm:$0xff]
    %v109 = vld [vmem:[#allocation8 + $0x8] sm:$0xff]
    %v110 = vld [vmem:[#allocation8 + $0x10] sm:$0xff]
    %v111 = vld [vmem:[#allocation8 + $0x18] sm:$0xff]
    %v112 = vld [vmem:[#allocation8 + $0x20] sm:$0xff]
    %v113 = vld [vmem:[#allocation8 + $0x28] sm:$0xff]
    %v114 = vld [vmem:[#allocation8 + $0x30] sm:$0xff]
    %v115 = vld [vmem:[#allocation8 + $0x38] sm:$0xff]
    %v116 = vld [vmem:[#allocation8 + $0x40] sm:$0xff]
    %v117 = vld [vmem:[#allocation8 + $0x48] sm:$0xff]
    %v118 = vld [vmem:[#allocation8 + $0x50] sm:$0xff]
    %v119 = vld [vmem:[#allocation8 + $0x58] sm:$0xff]
    %v120 = vld [vmem:[#allocation8 + $0x60] sm:$0xff]
    %v121 = vld [vmem:[#allocation8 + $0x68] sm:$0xff]
    %v122 = vld [vmem:[#allocation8 + $0x70] sm:$0xff]
    %v123 = vld [vmem:[#allocation8 + $0x78] sm:$0xff]
    %v124 = vld [vmem:[%s4] sm:$0x1]
    %v126 = vperm.slane %v124, 0
    %128 = vmatpush.msra.mxu0 %v123
    %129 = vmatpush.msra.mxu0 %v122
    %130 = vmatpush.msra.mxu0 %v121
    %131 = vmatpush.msra.mxu0 %v120
    %132 = vmatpush.msra.mxu0 %v119
    %133 = vmatpush.msra.mxu0 %v118
    %134 = vmatpush.msra.mxu0 %v117
    %135 = vmatpush.msra.mxu0 %v116
    %136 = vmatpush.msra.mxu0 %v115
    %137 = vmatpush.msra.mxu0 %v114
    %138 = vmatpush.msra.mxu0 %v113
    %139 = vmatpush.msra.mxu0 %v112
    %140 = vmatpush.msra.mxu0 %v111
    %141 = vmatpush.msra.mxu0 %v110
    %142 = vmatpush.msra.mxu0 %v109
    %143 = vmatpush.msra.mxu0 %v108
    %144 = vmatmul.f32.gmra.mxu0 %v107
    %v145 = vpop.f32.mrf.mxu0
    %v146 = vadd.f32 %v126, %v145
    %147 = vdwg.mxu0
    %148 = vst [vmem:[#allocation9] sm:$0xff] %v146
    // Predicated region
    $region34: #{tpu_custom_call.1} parent=1 // pred_check
      _
    $region35: #{tpu_custom_call.1} parent=1 // pred_check_branch
      %150 = sbr.rel (0) target = $region37
    $region36: #{tpu_custom_call.1} parent=1 // pred_region
      %152 = vsyncadd [#allocation5], 0
      %s154 = sshll.u32 [#allocation9], 4
      %s155 = int_to_ptr.vmem [resolvable:$true] %s154
      %s156 = sshll.u32 %s5, 4
      %s157 = int_to_ptr.hbm [resolvable:$true] %s156
      %159 = dma.vmem_to_hbm [thread:$0]  %s155, 128, %s157, [#allocation5]
    $region37: #{tpu_custom_call.1} parent=1 // pred_fallthru
      _
    // Predicated region
    $region38: #{tpu_custom_call.1} parent=1 // pred_check
      _
    $region39: #{tpu_custom_call.1} parent=1 // pred_check_branch
      %161 = sbr.rel (0) target = $region41
    $region40: #{tpu_custom_call.1} parent=1 // pred_region
      %163 = dma.done [#allocation5], 128
    $region41: #{tpu_custom_call.1} parent=1 // pred_fallthru
      _
    %164 = vsyncpa [#allocation4], 1
    %165 = vsyncpa [#allocation7], 1
    %166 = vsyncpa [#allocation5], 1

</llo_original>
